<compile_context>
chip_gen: v5e
topology: v5e:2x2
jax: 0.10.0
libtpu: 0.0.40
codegen_flags: <defaults>
</compile_context>

<pallas_src>
import functools

import jax
import jax.numpy as jnp
import numpy as np
from jax import lax
from jax.experimental import pallas as pl
from jax.experimental.pallas import tpu as pltpu

# ----------------------------------------------------------------------------
# Synthetic vocabulary standing in for squawkbox's TOKEN_TO_IDX / IDX_TO_TOKEN.
# ----------------------------------------------------------------------------
_SPECIAL = ["pad", "start", "end", "continue"]
_WAITS = [f"wait:{i}" for i in range(1, 61)]      # 60 wait tokens
_NOTES = [f"note_on:{i}" for i in range(64)]      # 64 note tokens
IDX_TO_TOKEN = _SPECIAL + _WAITS + _NOTES          # 128 tokens total
TOKEN_TO_IDX = {t: i for i, t in enumerate(IDX_TO_TOKEN)}

VOCAB = len(IDX_TO_TOKEN)   # 128
EMB = 128                   # embedding dim of synthetic decoder
HID = 128                   # hidden dim of synthetic decoder
_BLK = 128                  # tokens generated per grid step (lane-dense output block)


# ----------------------------------------------------------------------------
# Pallas kernel: one grid step == 128 autoregressive sampling steps.
# ----------------------------------------------------------------------------
def _decode_kernel(tok0_ref, ts0_ref, fused_ref, wt_ref, b1_ref, w2_ref, b2_ref,
                   tri_ref, delta_ref, u_ref,
                   out_ref,
                   onehot_ref, ts_ref,
                   *, temp, wallclock):
    B, V = onehot_ref.shape
    BLK = out_ref.shape[1]
    # iotas hoisted out of the token loop (JAX does not CSE broadcast_in_dim)
    lane = lax.broadcasted_iota(jnp.int32, (B, V), 1)
    out_lane = lax.broadcasted_iota(jnp.int32, (B, BLK), 1)

    # --- first grid step: initialize carried state from the resident inputs ---
    @pl.when(pl.program_id(0) == 0)
    def _():
        onehot_ref[...] = (lane == tok0_ref[...]).astype(onehot_ref.dtype)
        ts_ref[...] = ts0_ref[...]

    # resident operands, loaded once per grid step
    fused = fused_ref[...]        # (V, H) bf16  (= emb @ W1, fused in wrapper)
    wt = wt_ref[...]              # (1, H) f32
    b1 = b1_ref[...]              # (1, H) f32
    w2 = w2_ref[...]              # (H, V) bf16
    b2 = b2_ref[...]              # (1, V) f32
    tri = tri_ref[...]            # (V, V) bf16 upper-triangular (inclusive cumsum)
    delta_row = delta_ref[...]    # (1, V) f32 wallclock wait deltas
    u_blk = u_ref[...]            # (B, BLK) f32 uniforms in (0, 1), one lane per token
    inv_temp = jnp.float32(1.0 / temp)

    def body(t, carry):
        onehot, ts, out_acc = carry           # (B,V) bf16, (B,1) f32, (B,BLK) i32

        # synthetic decoder: h = tanh(onehot @ (emb·W1) + ts*wt + b1); logits = h @ W2 + b2
        h = jnp.tanh(jnp.dot(onehot, fused, preferred_element_type=jnp.float32)
                     + ts * wt + b1)                                          # (B,H) f32
        logits = jnp.dot(h.astype(w2.dtype), w2,
                         preferred_element_type=jnp.float32) + b2             # (B,V) f32

        # _temper: softmax(logits / temp) numerators (normalization folded into threshold)
        z = logits * inv_temp
        z = z - jnp.max(z, axis=-1, keepdims=True)
        e = jnp.exp(z)
        # _sample: probs[:, 0] = 0  (pad token never sampled)
        e = jnp.where(lane == 0, 0.0, e)

        # inverse-CDF multinomial: inclusive cumsum via resident upper-tri matmul
        cum = jnp.dot(e.astype(tri.dtype), tri,
                      preferred_element_type=jnp.float32)                     # (B,V) f32
        total = jnp.max(cum, axis=-1, keepdims=True)                          # == cum[:, -1]
        u = jnp.sum(jnp.where(out_lane == t, u_blk, 0.0),
                    axis=-1, keepdims=True)                                   # (B,1) in (0,1)
        thr = u * total
        idx = jnp.sum((cum < thr).astype(jnp.int32), axis=-1, keepdims=True)  # (B,1)
        idx = jnp.minimum(idx, V - 1)        # float-rounding guard; idx>=1 since cum[:,0]=0

        # stash the sample into lane t of the block accumulator (register, no VMEM RMW)
        out_acc = jnp.where(out_lane == t, idx, out_acc)

        # carry state to the next token
        onehot_next = (lane == idx).astype(onehot.dtype)
        if wallclock:
            delta = jnp.sum(jnp.where(lane == idx, delta_row, 0.0),
                            axis=-1, keepdims=True)                           # (B,1)
            ts_next = ts + delta
        else:  # positional
            ts_next = ts + jnp.float32(1.0)
        return onehot_next, ts_next, out_acc

    init = (onehot_ref[...], ts_ref[...], jnp.zeros((B, BLK), jnp.int32))
    onehot_f, ts_f, out_acc = lax.fori_loop(0, BLK, body, init)

    # persist carried state for the next grid step; one unmasked lane-dense store
    onehot_ref[...] = onehot_f
    ts_ref[...] = ts_f
    out_ref[...] = out_acc


@functools.partial(jax.jit, static_argnames=("temp", "max_length", "wallclock"))
def _generate(tok0, ts0, uniforms, fused, wt, b1, w2, b2, tri, delta_row,
              *, temp, max_length, wallclock):
    B = tok0.shape[0]
    L = int(max_length)
    L_pad = uniforms.shape[1]
    n_blocks = L_pad // _BLK
    const = lambda g: (0, 0)   # resident blocks: DMA'd once, reused every grid step

    out = pl.pallas_call(
        functools.partial(_decode_kernel, temp=float(temp), wallclock=bool(wallclock)),
        grid=(n_blocks,),
        in_specs=[
            pl.BlockSpec(tok0.shape, const),       # (B,1) i32
            pl.BlockSpec(ts0.shape, const),        # (B,1) f32
            pl.BlockSpec(fused.shape, const),      # (V,H) bf16
            pl.BlockSpec(wt.shape, const),         # (1,H) f32
            pl.BlockSpec(b1.shape, const),         # (1,H) f32
            pl.BlockSpec(w2.shape, const),         # (H,V) bf16
            pl.BlockSpec(b2.shape, const),         # (1,V) f32
            pl.BlockSpec(tri.shape, const),        # (V,V) bf16 upper-tri
            pl.BlockSpec(delta_row.shape, const),  # (1,V) f32
            pl.BlockSpec((B, _BLK), lambda g: (0, g)),   # uniforms, one block per step
        ],
        out_specs=pl.BlockSpec((B, _BLK), lambda g: (0, g)),
        out_shape=jax.ShapeDtypeStruct((B, L_pad), jnp.int32),
        scratch_shapes=[
            pltpu.VMEM((B, VOCAB), jnp.bfloat16),   # one-hot of last sampled token
            pltpu.VMEM((B, 1), jnp.float32),        # last timestamp
        ],
        compiler_params=pltpu.CompilerParams(
            dimension_semantics=("arbitrary",)),    # sequential dependence through scratch
    )(tok0, ts0, fused, wt, b1, w2, b2, tri, delta_row, uniforms)
    return out[:, :L]


# ----------------------------------------------------------------------------
# Sampler: mirrors the PyTorch module's forward() semantics.
# ----------------------------------------------------------------------------
class Sampler:
    def __init__(self, decoder_params, embedding_type, temp=None, top_k=None,
                 top_p=None, max_length=4096, key=None):
        if embedding_type not in ("positional", "wallclock"):
            raise ValueError(embedding_type)
        self.temp = temp
        self.top_k = top_k
        self.top_p = top_p
        self.embedding_type = embedding_type
        self.max_length = max_length
        self.SOS = TOKEN_TO_IDX["start"]
        self.EOS = TOKEN_TO_IDX["end"]
        self.padding = TOKEN_TO_IDX["pad"]
        self.cont = TOKEN_TO_IDX["continue"]

        k = key if key is not None else jax.random.PRNGKey(0)
        k_pos, self._key = jax.random.split(k)
        # nn.Embedding(len(IDX_TO_TOKEN), 1) — present in __init__, unused in forward.
        self.pos_adjustment = 0.02 * jax.random.normal(k_pos, (VOCAB, 1), jnp.float32)

        emb, w1, wt, b1, w2, b2 = decoder_params
        # Algebraic fusion: no nonlinearity between emb and W1 -> one (V,H) table.
        self._fused = jnp.dot(emb, w1).astype(jnp.bfloat16)          # (V,H) bf16
        self._wt = jnp.asarray(wt, jnp.float32)                      # (1,H)
        self._b1 = jnp.asarray(b1, jnp.float32)                      # (1,H)
        self._w2 = jnp.asarray(w2).astype(jnp.bfloat16)              # (H,V) bf16
        self._b2 = jnp.asarray(b2, jnp.float32)                      # (1,V)
        # wallclock delta row: int(tok.split(':')[-1]) if 'wait' in tok else 0
        self._delta_row = jnp.array(
            [[float(t.split(":")[-1]) if "wait" in t else 0.0 for t in IDX_TO_TOKEN]],
            dtype=jnp.float32)                                       # (1,V)
        # upper-triangular (i <= j) matrix for inclusive cumsum-by-matmul
        self._tri = jnp.asarray(np.triu(np.ones((VOCAB, VOCAB), np.float32))
                                ).astype(jnp.bfloat16)               # (V,V) bf16

    def _to_tokens(self, src):
        out = []
        for sequence in np.asarray(src):
            tokens = [IDX_TO_TOKEN[int(i)] for i in sequence.tolist()]
            if "end" in tokens:
                out.append(tokens[: tokens.index("end")])
            else:
                out.append(tokens)
        return out

    def forward(self, src=None, timestamps=None, batch_size=None, **kwargs):
        if src is not None:
            assert timestamps is not None
            src = jnp.asarray(src, jnp.int32)
            timestamps = jnp.asarray(timestamps, jnp.float32)
            assert src.shape == timestamps.shape
            batch_size = src.shape[0]
            prefix = np.asarray(src)
            tok0 = src[:, -1:]
            ts0 = timestamps[:, -1:]
        else:
            assert batch_size is not None
            prefix = np.full((batch_size, 1), self.SOS, dtype=np.int32)
            tok0 = jnp.full((batch_size, 1), self.SOS, dtype=jnp.int32)
            ts0 = jnp.zeros((batch_size, 1), jnp.float32)

        temp = 1.0 if self.temp is None else float(self.temp)
        if self.top_k is not None or self.top_p is not None:
            # TODO(synk): top-k / top-p require a full vocab sort; no clean Pallas TPU
            # sort — falling back to plain tempered multinomial sampling.
            pass

        # Host-side uniforms (in-kernel hardware PRNG has no interpret/CPU lowering).
        n_blocks = (self.max_length + _BLK - 1) // _BLK
        L_pad = max(n_blocks, 1) * _BLK
        self._key, sub = jax.random.split(self._key)
        uniforms = jax.random.uniform(sub, (batch_size, L_pad), jnp.float32,
                                      minval=1e-7, maxval=1.0)

        gen = _generate(tok0, ts0, uniforms,
                        self._fused, self._wt, self._b1, self._w2, self._b2,
                        self._tri, self._delta_row,
                        temp=temp, max_length=self.max_length,
                        wallclock=(self.embedding_type == "wallclock"))
        gen = jax.block_until_ready(gen)                      # (B, max_length) int32
        full = np.concatenate([prefix, np.asarray(gen)], axis=1)
        return self._to_tokens(full)


# ----------------------------------------------------------------------------
# Deterministic synthetic decoder parameters (stand-in for the injected decoder).
# ----------------------------------------------------------------------------
def make_decoder_params(key):
    ks = jax.random.split(key, 5)
    emb = 0.05 * jax.random.normal(ks[0], (VOCAB, EMB), jnp.float32)
    w1 = 0.05 * jax.random.normal(ks[1], (EMB, HID), jnp.float32)
    wt = 0.05 * jax.random.normal(ks[2], (1, HID), jnp.float32)
    b1 = jnp.zeros((1, HID), jnp.float32)
    w2 = 0.05 * jax.random.normal(ks[3], (HID, VOCAB), jnp.float32)
    b2 = jnp.zeros((1, VOCAB), jnp.float32)
    return (emb, w1, wt, b1, w2, b2)


if __name__ == "__main__":
    key = jax.random.PRNGKey(0)
    params = make_decoder_params(key)

    # batch=8 fills the f32 sublane tile; max_length kept small for the smoke test.
    sampler = Sampler(decoder_params=params, embedding_type="positional",
                      temp=0.9, max_length=16, key=key)
    samples = sampler.forward(batch_size=8)
    assert len(samples) == 8
    for seq in samples:
        assert all(isinstance(t, str) for t in seq)
        assert len(seq) <= 1 + sampler.max_length
        assert seq[0] == "start"
        assert "pad" not in seq[1:]          # probs[:, 0] = 0 forbids sampling pad

    sampler_wc = Sampler(decoder_params=params, embedding_type="wallclock",
                         temp=1.0, max_length=16, key=key)
    samples_wc = sampler_wc.forward(batch_size=8)
    assert len(samples_wc) == 8
    for seq in samples_wc:
        assert len(seq) <= 1 + sampler_wc.max_length
        assert "pad" not in seq[1:]

    # prompt-continuation path (src + timestamps provided)
    src = np.tile(np.array([[TOKEN_TO_IDX["start"],
                             TOKEN_TO_IDX["note_on:3"],
                             TOKEN_TO_IDX["wait:5"]]], np.int32), (8, 1))
    ts = np.tile(np.array([[0.0, 0.0, 5.0]], np.float32), (8, 1))
    samples_c = sampler_wc.forward(src=src, timestamps=ts)
    assert len(samples_c) == 8
    for seq in samples_c:
        assert len(seq) <= src.shape[1] + sampler_wc.max_length

    print("KERNEL_OK")
</pallas_src>

<mosaic_0001>
module attributes {stable_mosaic.version = 11 : i64} {
  func.func @_decode_kernel(%arg0: i32, %arg1: memref<8x1xi32, #tpu.memory_space<vmem>>, %arg2: memref<8x1xf32, #tpu.memory_space<vmem>>, %arg3: memref<128x128xbf16, #tpu.memory_space<vmem>>, %arg4: memref<1x128xf32, #tpu.memory_space<vmem>>, %arg5: memref<1x128xf32, #tpu.memory_space<vmem>>, %arg6: memref<128x128xbf16, #tpu.memory_space<vmem>>, %arg7: memref<1x128xf32, #tpu.memory_space<vmem>>, %arg8: memref<128x128xbf16, #tpu.memory_space<vmem>>, %arg9: memref<1x128xf32, #tpu.memory_space<vmem>>, %arg10: memref<8x128xf32, #tpu.memory_space<vmem>>, %arg11: memref<8x128xi32, #tpu.memory_space<vmem>>, %arg12: memref<8x128xbf16, #tpu.memory_space<vmem>>, %arg13: memref<8x1xf32, #tpu.memory_space<vmem>>) attributes {dimension_semantics = [#tpu.dimension_semantics<arbitrary>], iteration_bounds = array<i64: 1>, scalar_prefetch = 0 : i64, scratch_operands = 2 : i64, tpu.core_type = #tpu.core_type<tc>, window_params = [{pipeline_mode = #tpu.pipeline_mode<synchronous>, transform_indices = @transform_0, window_bounds = array<i64: 8, 1>}, {pipeline_mode = #tpu.pipeline_mode<synchronous>, transform_indices = @transform_1, window_bounds = array<i64: 8, 1>}, {pipeline_mode = #tpu.pipeline_mode<synchronous>, transform_indices = @transform_2, window_bounds = array<i64: 128, 128>}, {pipeline_mode = #tpu.pipeline_mode<synchronous>, transform_indices = @transform_3, window_bounds = array<i64: 1, 128>}, {pipeline_mode = #tpu.pipeline_mode<synchronous>, transform_indices = @transform_4, window_bounds = array<i64: 1, 128>}, {pipeline_mode = #tpu.pipeline_mode<synchronous>, transform_indices = @transform_5, window_bounds = array<i64: 128, 128>}, {pipeline_mode = #tpu.pipeline_mode<synchronous>, transform_indices = @transform_6, window_bounds = array<i64: 1, 128>}, {pipeline_mode = #tpu.pipeline_mode<synchronous>, transform_indices = @transform_7, window_bounds = array<i64: 128, 128>}, {pipeline_mode = #tpu.pipeline_mode<synchronous>, transform_indices = @transform_8, window_bounds = array<i64: 1, 128>}, {transform_indices = @transform_9, window_bounds = array<i64: 8, 128>}, {transform_indices = @transform_10, window_bounds = array<i64: 8, 128>}]} {
    %0 = tpu.iota {dimensions = array<i32: 1>} : vector<8x128xi32>
    %1 = tpu.iota {dimensions = array<i32: 1>} : vector<8x128xi32>
    %c0_i32 = arith.constant 0 : i32
    %2 = arith.cmpi eq, %arg0, %c0_i32 : i32
    %3 = arith.extui %2 : i1 to i32
    %c0_i32_0 = arith.constant 0 : i32
    %4 = arith.cmpi ne, %3, %c0_i32_0 : i32
    scf.if %4 {
      %c0_27 = arith.constant 0 : index
      %c0_28 = arith.constant 0 : index
      %20 = vector.load %arg1[%c0_27, %c0_28] : memref<8x1xi32, #tpu.memory_space<vmem>>, vector<8x1xi32>
      %21 = vector.broadcast %20 : vector<8x1xi32> to vector<8x128xi32>
      %22 = arith.cmpi eq, %0, %21 : vector<8x128xi32>
      %23 = arith.extui %22 : vector<8x128xi1> to vector<8x128xi32>
      %24 = arith.sitofp %23 : vector<8x128xi32> to vector<8x128xf32>
      %25 = arith.truncf %24 : vector<8x128xf32> to vector<8x128xbf16>
      %c0_29 = arith.constant 0 : index
      %c0_30 = arith.constant 0 : index
      %26 = vector.load %arg12[%c0_29, %c0_30] : memref<8x128xbf16, #tpu.memory_space<vmem>>, vector<8x128xbf16>
      tpu.vector_store %arg12[%c0_29, %c0_30], %25 {strides = array<i32>} : memref<8x128xbf16, #tpu.memory_space<vmem>>, vector<8x128xbf16>,
      %c0_31 = arith.constant 0 : index
      %c0_32 = arith.constant 0 : index
      %27 = vector.load %arg2[%c0_31, %c0_32] : memref<8x1xf32, #tpu.memory_space<vmem>>, vector<8x1xf32>
      %c0_33 = arith.constant 0 : index
      %c0_34 = arith.constant 0 : index
      %28 = vector.load %arg13[%c0_33, %c0_34] : memref<8x1xf32, #tpu.memory_space<vmem>>, vector<8x1xf32>
      tpu.vector_store %arg13[%c0_33, %c0_34], %27 {strides = array<i32>} : memref<8x1xf32, #tpu.memory_space<vmem>>, vector<8x1xf32>,
    } else {
    }
    %c0 = arith.constant 0 : index
    %c0_1 = arith.constant 0 : index
    %5 = vector.load %arg3[%c0, %c0_1] : memref<128x128xbf16, #tpu.memory_space<vmem>>, vector<128x128xbf16>
    %c0_2 = arith.constant 0 : index
    %c0_3 = arith.constant 0 : index
    %6 = vector.load %arg4[%c0_2, %c0_3] : memref<1x128xf32, #tpu.memory_space<vmem>>, vector<1x128xf32>
    %c0_4 = arith.constant 0 : index
    %c0_5 = arith.constant 0 : index
    %7 = vector.load %arg5[%c0_4, %c0_5] : memref<1x128xf32, #tpu.memory_space<vmem>>, vector<1x128xf32>
    %c0_6 = arith.constant 0 : index
    %c0_7 = arith.constant 0 : index
    %8 = vector.load %arg6[%c0_6, %c0_7] : memref<128x128xbf16, #tpu.memory_space<vmem>>, vector<128x128xbf16>
    %c0_8 = arith.constant 0 : index
    %c0_9 = arith.constant 0 : index
    %9 = vector.load %arg7[%c0_8, %c0_9] : memref<1x128xf32, #tpu.memory_space<vmem>>, vector<1x128xf32>
    %c0_10 = arith.constant 0 : index
    %c0_11 = arith.constant 0 : index
    %10 = vector.load %arg8[%c0_10, %c0_11] : memref<128x128xbf16, #tpu.memory_space<vmem>>, vector<128x128xbf16>
    %c0_12 = arith.constant 0 : index
    %c0_13 = arith.constant 0 : index
    %11 = vector.load %arg10[%c0_12, %c0_13] : memref<8x128xf32, #tpu.memory_space<vmem>>, vector<8x128xf32>
    %c0_14 = arith.constant 0 : index
    %c0_15 = arith.constant 0 : index
    %12 = vector.load %arg12[%c0_14, %c0_15] : memref<8x128xbf16, #tpu.memory_space<vmem>>, vector<8x128xbf16>
    %c0_16 = arith.constant 0 : index
    %c0_17 = arith.constant 0 : index
    %13 = vector.load %arg13[%c0_16, %c0_17] : memref<8x1xf32, #tpu.memory_space<vmem>>, vector<8x1xf32>
    %c0_i32_18 = arith.constant 0 : i32
    %14 = vector.broadcast %c0_i32_18 : i32 to vector<8x128xi32>
    %cst = arith.constant 1.11111116 : f32
    %c0_i32_19 = arith.constant 0 : i32
    %c128_i32 = arith.constant 128 : i32
    %15 = arith.addi %c0_i32_19, %c128_i32 : i32
    %c1_i32 = arith.constant 1 : i32
    %16:3 = scf.for %arg14 = %c0_i32_19 to %15 step %c1_i32 iter_args(%arg15 = %12, %arg16 = %13, %arg17 = %14) -> (vector<8x128xbf16>, vector<8x1xf32>, vector<8x128xi32>)  : i32 {
      %cst_27 = arith.constant dense<0.000000e+00> : vector<8x128xf32>
      %20 = tpu.matmul %arg15, %5, %cst_27 {dimension_numbers = #tpu.dot_dimension_numbers<[1], [0], [0], [1], [0, 0, 1, 1], [], []>} : vector<8x128xbf16>, vector<128x128xbf16>, vector<8x128xf32> -> vector<8x128xf32>
      %21 = vector.broadcast %arg16 : vector<8x1xf32> to vector<8x128xf32>
      %22 = vector.broadcast %6 : vector<1x128xf32> to vector<8x128xf32>
      %23 = arith.mulf %21, %22 : vector<8x128xf32>
      %24 = arith.addf %20, %23 : vector<8x128xf32>
      %25 = vector.broadcast %7 : vector<1x128xf32> to vector<8x128xf32>
      %26 = arith.addf %24, %25 : vector<8x128xf32>
      %27 = math.tanh %26 : vector<8x128xf32>
      %28 = arith.truncf %27 : vector<8x128xf32> to vector<8x128xbf16>
      %cst_28 = arith.constant dense<0.000000e+00> : vector<8x128xf32>
      %29 = tpu.matmul %28, %8, %cst_28 {dimension_numbers = #tpu.dot_dimension_numbers<[1], [0], [0], [1], [0, 0, 1, 1], [], []>} : vector<8x128xbf16>, vector<128x128xbf16>, vector<8x128xf32> -> vector<8x128xf32>
      %30 = vector.broadcast %9 : vector<1x128xf32> to vector<8x128xf32>
      %31 = arith.addf %29, %30 : vector<8x128xf32>
      %32 = vector.broadcast %cst : f32 to vector<8x128xf32>
      %33 = arith.mulf %31, %32 : vector<8x128xf32>
      %cst_29 = arith.constant dense<0xFF800000> : vector<8xf32>
      %34 = vector.multi_reduction <maximumf>, %33, %cst_29 [1] : vector<8x128xf32> to vector<8xf32>
      %35 = vector.shape_cast %34 : vector<8xf32> to vector<8x1xf32>
      %36 = vector.broadcast %35 : vector<8x1xf32> to vector<8x128xf32>
      %37 = arith.subf %33, %36 : vector<8x128xf32>
      %38 = math.exp %37 : vector<8x128xf32>
      %c0_i32_30 = arith.constant 0 : i32
      %39 = vector.broadcast %c0_i32_30 : i32 to vector<8x128xi32>
      %40 = arith.cmpi eq, %0, %39 : vector<8x128xi32>
      %cst_31 = arith.constant 0.000000e+00 : f32
      %41 = vector.broadcast %cst_31 : f32 to vector<8x128xf32>
      %42 = arith.select %40, %41, %38 : vector<8x128xi1>, vector<8x128xf32>
      %43 = arith.truncf %42 : vector<8x128xf32> to vector<8x128xbf16>
      %cst_32 = arith.constant dense<0.000000e+00> : vector<8x128xf32>
      %44 = tpu.matmul %43, %10, %cst_32 {dimension_numbers = #tpu.dot_dimension_numbers<[1], [0], [0], [1], [0, 0, 1, 1], [], []>} : vector<8x128xbf16>, vector<128x128xbf16>, vector<8x128xf32> -> vector<8x128xf32>
      %cst_33 = arith.constant dense<0xFF800000> : vector<8xf32>
      %45 = vector.multi_reduction <maximumf>, %44, %cst_33 [1] : vector<8x128xf32> to vector<8xf32>
      %46 = vector.shape_cast %45 : vector<8xf32> to vector<8x1xf32>
      %47 = vector.broadcast %arg14 : i32 to vector<8x128xi32>
      %48 = arith.cmpi eq, %1, %47 : vector<8x128xi32>
      %cst_34 = arith.constant 0.000000e+00 : f32
      %49 = vector.broadcast %cst_34 : f32 to vector<8x128xf32>
      %50 = arith.select %48, %11, %49 : vector<8x128xi1>, vector<8x128xf32>
      %cst_35 = arith.constant dense<0.000000e+00> : vector<8xf32>
      %51 = vector.multi_reduction <add>, %50, %cst_35 [1] : vector<8x128xf32> to vector<8xf32>
      %52 = vector.shape_cast %51 : vector<8xf32> to vector<8x1xf32>
      %53 = arith.mulf %52, %46 : vector<8x1xf32>
      %54 = vector.broadcast %53 : vector<8x1xf32> to vector<8x128xf32>
      %55 = arith.cmpf olt, %44, %54 : vector<8x128xf32>
      %56 = arith.extui %55 : vector<8x128xi1> to vector<8x128xi32>
      %cst_36 = arith.constant dense<0> : vector<8xi32>
      %57 = vector.multi_reduction <add>, %56, %cst_36 [1] : vector<8x128xi32> to vector<8xi32>
      %58 = vector.shape_cast %57 : vector<8xi32> to vector<8x1xi32>
      %c127_i32 = arith.constant 127 : i32
      %59 = vector.broadcast %c127_i32 : i32 to vector<8x1xi32>
      %60 = arith.minsi %58, %59 : vector<8x1xi32>
      %61 = vector.broadcast %arg14 : i32 to vector<8x128xi32>
      %62 = arith.cmpi eq, %1, %61 : vector<8x128xi32>
      %63 = vector.shape_cast %60 : vector<8x1xi32> to vector<8x1xi32>
      %64 = vector.broadcast %63 : vector<8x1xi32> to vector<8x128xi32>
      %65 = arith.select %62, %64, %arg17 : vector<8x128xi1>, vector<8x128xi32>
      %66 = vector.broadcast %60 : vector<8x1xi32> to vector<8x128xi32>
      %67 = arith.cmpi eq, %0, %66 : vector<8x128xi32>
      %68 = arith.extui %67 : vector<8x128xi1> to vector<8x128xi32>
      %69 = arith.sitofp %68 : vector<8x128xi32> to vector<8x128xf32>
      %70 = arith.truncf %69 : vector<8x128xf32> to vector<8x128xbf16>
      %cst_37 = arith.constant 1.000000e+00 : f32
      %71 = vector.broadcast %cst_37 : f32 to vector<8x1xf32>
      %72 = arith.addf %arg16, %71 : vector<8x1xf32>
      scf.yield %70, %72, %65 : vector<8x128xbf16>, vector<8x1xf32>, vector<8x128xi32>
    }
    %c128_i32_20 = arith.constant 128 : i32
    %c0_21 = arith.constant 0 : index
    %c0_22 = arith.constant 0 : index
    %17 = vector.load %arg12[%c0_21, %c0_22] : memref<8x128xbf16, #tpu.memory_space<vmem>>, vector<8x128xbf16>
    tpu.vector_store %arg12[%c0_21, %c0_22], %16#0 {strides = array<i32>} : memref<8x128xbf16, #tpu.memory_space<vmem>>, vector<8x128xbf16>,
    %c0_23 = arith.constant 0 : index
    %c0_24 = arith.constant 0 : index
    %18 = vector.load %arg13[%c0_23, %c0_24] : memref<8x1xf32, #tpu.memory_space<vmem>>, vector<8x1xf32>
    tpu.vector_store %arg13[%c0_23, %c0_24], %16#1 {strides = array<i32>} : memref<8x1xf32, #tpu.memory_space<vmem>>, vector<8x1xf32>,
    %c0_25 = arith.constant 0 : index
    %c0_26 = arith.constant 0 : index
    %19 = vector.load %arg11[%c0_25, %c0_26] : memref<8x128xi32, #tpu.memory_space<vmem>>, vector<8x128xi32>
    tpu.vector_store %arg11[%c0_25, %c0_26], %16#2 {strides = array<i32>} : memref<8x128xi32, #tpu.memory_space<vmem>>, vector<8x128xi32>,
    return
  }
  func.func @transform_0(%arg0: i32) -> (i32, i32) {
    %c0_i32 = arith.constant 0 : i32
    %c0_i32_0 = arith.constant 0 : i32
    %c0_i32_1 = arith.constant 0 : i32
    return %c0_i32, %c0_i32_0 : i32, i32
  }
  func.func @transform_1(%arg0: i32) -> (i32, i32) {
    %c0_i32 = arith.constant 0 : i32
    %c0_i32_0 = arith.constant 0 : i32
    %c0_i32_1 = arith.constant 0 : i32
    return %c0_i32, %c0_i32_0 : i32, i32
  }
  func.func @transform_2(%arg0: i32) -> (i32, i32) {
    %c0_i32 = arith.constant 0 : i32
    %c0_i32_0 = arith.constant 0 : i32
    %c0_i32_1 = arith.constant 0 : i32
    return %c0_i32, %c0_i32_0 : i32, i32
  }
  func.func @transform_3(%arg0: i32) -> (i32, i32) {
    %c0_i32 = arith.constant 0 : i32
    %c0_i32_0 = arith.constant 0 : i32
    %c0_i32_1 = arith.constant 0 : i32
    return %c0_i32, %c0_i32_0 : i32, i32
  }
  func.func @transform_4(%arg0: i32) -> (i32, i32) {
    %c0_i32 = arith.constant 0 : i32
    %c0_i32_0 = arith.constant 0 : i32
    %c0_i32_1 = arith.constant 0 : i32
    return %c0_i32, %c0_i32_0 : i32, i32
  }
  func.func @transform_5(%arg0: i32) -> (i32, i32) {
    %c0_i32 = arith.constant 0 : i32
    %c0_i32_0 = arith.constant 0 : i32
    %c0_i32_1 = arith.constant 0 : i32
    return %c0_i32, %c0_i32_0 : i32, i32
  }
  func.func @transform_6(%arg0: i32) -> (i32, i32) {
    %c0_i32 = arith.constant 0 : i32
    %c0_i32_0 = arith.constant 0 : i32
    %c0_i32_1 = arith.constant 0 : i32
    return %c0_i32, %c0_i32_0 : i32, i32
  }
  func.func @transform_7(%arg0: i32) -> (i32, i32) {
    %c0_i32 = arith.constant 0 : i32
    %c0_i32_0 = arith.constant 0 : i32
    %c0_i32_1 = arith.constant 0 : i32
    return %c0_i32, %c0_i32_0 : i32, i32
  }
  func.func @transform_8(%arg0: i32) -> (i32, i32) {
    %c0_i32 = arith.constant 0 : i32
    %c0_i32_0 = arith.constant 0 : i32
    %c0_i32_1 = arith.constant 0 : i32
    return %c0_i32, %c0_i32_0 : i32, i32
  }
  func.func @transform_9(%arg0: i32) -> (i32, i32) {
    %c0_i32 = arith.constant 0 : i32
    %c0_i32_0 = arith.constant 0 : i32
    return %c0_i32, %arg0 : i32, i32
  }
  func.func @transform_10(%arg0: i32) -> (i32, i32) {
    %c0_i32 = arith.constant 0 : i32
    %c0_i32_0 = arith.constant 0 : i32
    return %c0_i32, %arg0 : i32, i32
  }
}

</mosaic_0001>

<llo_original>
// kernel: _generate.1
$region0: #{_generate.1}
  #allocation0 [shape = 'u32[]', space=smem, size = 0x4, offset = 0x4, fixed_abs, tag = 'smem constant byte address 0x4 - core index']
  #allocation1 [shape = 'u32[72,128]{1,0:T(1,128)}', space=vmem, size = 0x9000, scoped, tag = 'internal scratch']
  #allocation2 [shape = 'bf16[8,128]{1,0:T(8,128)(2,1)}', space=vmem, size = 0x800, scoped, tag = 'scratch operand']
  #allocation3 [shape = 'f32[8,1]{1,0:T(8,128)}', space=vmem, size = 0x1000, scoped, tag = 'scratch operand']
  %s0 = inlined_call_operand.vmem [shape: s32[8,1], index: 0, kind: input, shape index: {}]
  %s1 = inlined_call_operand.vmem [shape: f32[8,1], index: 1, kind: input, shape index: {}]
  %s2 = inlined_call_operand.hbm [shape: bf16[128,128], index: 2, kind: input, shape index: {}]
  %s3 = inlined_call_operand.vmem [shape: f32[1,128], index: 3, kind: input, shape index: {}]
  %s4 = inlined_call_operand.vmem [shape: f32[1,128], index: 4, kind: input, shape index: {}]
  %s5 = inlined_call_operand.hbm [shape: bf16[128,128], index: 5, kind: input, shape index: {}]
  %s6 = inlined_call_operand.vmem [shape: f32[1,128], index: 6, kind: input, shape index: {}]
  %s7 = inlined_call_operand.hbm [shape: bf16[128,128], index: 7, kind: input, shape index: {}]
  %s8 = inlined_call_operand.vmem [shape: f32[1,128], index: 8, kind: input, shape index: {}]
  %s9 = inlined_call_operand.vmem [shape: f32[8,128], index: 9, kind: input, shape index: {}]
  %s10 = inlined_call_operand.hbm [shape: s32[8,128], index: 10, kind: output, shape index: {}]
  %s11 = sld [smem:[#allocation0]]
  $region73: #{_generate.1} parent=0
    _
  %s13 = ssub.s32 1, %s11
  %s14 = scalar_select 0, %s13, %s11
  $region1: #{_generate.1} parent=0
    #allocation4 [shape = 'u8[32768]{0}', space=vmem, size = 0x8000, scoped, tag = 'input window, operand 2, single buffered']
    #allocation5 [shape = 's32[1]{0}', space=sflag, size = 0x4, scoped, tag = 'scoped memory for _generate.1']
    #allocation6 [shape = 's32[1]{0}', space=sflag, size = 0x4, scoped, tag = 'scoped memory for _generate.1']
    #allocation7 [shape = 'u8[32768]{0}', space=vmem, size = 0x8000, scoped, tag = 'input window, operand 5, single buffered']
    #allocation8 [shape = 's32[1]{0}', space=sflag, size = 0x4, scoped, tag = 'scoped memory for _generate.1']
    #allocation9 [shape = 'u8[32768]{0}', space=vmem, size = 0x8000, scoped, tag = 'input window, operand 7, single buffered']
    #allocation10 [shape = 'u8[4096]{0}', space=vmem, size = 0x1000, scoped, tag = 'output window, operand 0, single buffered']
    %15 = vsyncpa [#allocation5], 0
    %16 = vsyncpa [#allocation8], 0
    %17 = vsyncpa [#allocation6], 0
    // Predicated region
    $region2: #{_generate.1} parent=1 // pred_check
      _
    $region3: #{_generate.1} parent=1 // pred_check_branch
      %19 = sbr.rel (0) target = $region5
    $region4: #{_generate.1} parent=1 // pred_region
      _
    $region5: #{_generate.1} parent=1 // pred_fallthru
      _
    // Predicated region
    $region6: #{_generate.1} parent=1 // pred_check
      _
    $region7: #{_generate.1} parent=1 // pred_check_branch
      %21 = sbr.rel (0) target = $region9
    $region8: #{_generate.1} parent=1 // pred_region
      _
    $region9: #{_generate.1} parent=1 // pred_fallthru
      _
    // Predicated region
    $region10: #{_generate.1} parent=1 // pred_check
      _
    $region11: #{_generate.1} parent=1 // pred_check_branch
      %23 = sbr.rel (0) target = $region13
    $region12: #{_generate.1} parent=1 // pred_region
      %25 = vsyncadd [#allocation5], 0
      %s26 = sshll.u32 %s2, 4
      %s27 = int_to_ptr.hbm [resolvable:$true] %s26
      %s28 = sshll.u32 [#allocation4], 4
      %s29 = int_to_ptr.vmem [resolvable:$true] %s28
      %34 = dma.hbm_to_vmem [thread:$0]  %s27, 1024, %s29, [#allocation5], 64, 64, 4
    $region13: #{_generate.1} parent=1 // pred_fallthru
      _
    // Predicated region
    $region14: #{_generate.1} parent=1 // pred_check
      _
    $region15: #{_generate.1} parent=1 // pred_check_branch
      %36 = sbr.rel (0) target = $region17
    $region16: #{_generate.1} parent=1 // pred_region
      _
    $region17: #{_generate.1} parent=1 // pred_fallthru
      _
    // Predicated region
    $region18: #{_generate.1} parent=1 // pred_check
      _
    $region19: #{_generate.1} parent=1 // pred_check_branch
      %38 = sbr.rel (0) target = $region21
    $region20: #{_generate.1} parent=1 // pred_region
      _
    $region21: #{_generate.1} parent=1 // pred_fallthru
      _
    // Predicated region
    $region22: #{_generate.1} parent=1 // pred_check
      _
    $region23: #{_generate.1} parent=1 // pred_check_branch
      %40 = sbr.rel (0) target = $region25
    $region24: #{_generate.1} parent=1 // pred_region
      %42 = vsyncadd [#allocation8], 0
      %s43 = sshll.u32 %s5, 4
      %s44 = int_to_ptr.hbm [resolvable:$true] %s43
      %s45 = sshll.u32 [#allocation7], 4
      %s46 = int_to_ptr.vmem [resolvable:$true] %s45
      %51 = dma.hbm_to_vmem [thread:$0]  %s44, 1024, %s46, [#allocation8], 64, 64, 4
    $region25: #{_generate.1} parent=1 // pred_fallthru
      _
    // Predicated region
    $region26: #{_generate.1} parent=1 // pred_check
      _
    $region27: #{_generate.1} parent=1 // pred_check_branch
      %53 = sbr.rel (0) target = $region29
    $region28: #{_generate.1} parent=1 // pred_region
      _
    $region29: #{_generate.1} parent=1 // pred_fallthru
      _
    // Predicated region
    $region30: #{_generate.1} parent=1 // pred_check
      _
    $region31: #{_generate.1} parent=1 // pred_check_branch
      %55 = sbr.rel (0) target = $region33
    $region32: #{_generate.1} parent=1 // pred_region
      %57 = vsyncadd [#allocation8], 0
      %s58 = sshll.u32 %s7, 4
      %s59 = int_to_ptr.hbm [resolvable:$true] %s58
      %s60 = sshll.u32 [#allocation9], 4
      %s61 = int_to_ptr.vmem [resolvable:$true] %s60
      %66 = dma.hbm_to_vmem [thread:$0]  %s59, 1024, %s61, [#allocation8], 64, 64, 4
    $region33: #{_generate.1} parent=1 // pred_fallthru
      _
    // Predicated region
    $region34: #{_generate.1} parent=1 // pred_check
      _
    $region35: #{_generate.1} parent=1 // pred_check_branch
      %68 = sbr.rel (0) target = $region37
    $region36: #{_generate.1} parent=1 // pred_region
      _
    $region37: #{_generate.1} parent=1 // pred_fallthru
      _
    // Predicated region
    $region38: #{_generate.1} parent=1 // pred_check
      _
    $region39: #{_generate.1} parent=1 // pred_check_branch
      %70 = sbr.rel (0) target = $region41
    $region40: #{_generate.1} parent=1 // pred_region
      _
    $region41: #{_generate.1} parent=1 // pred_fallthru
      _
    // Predicated region
    $region42: #{_generate.1} parent=1 // pred_check
      _
    $region43: #{_generate.1} parent=1 // pred_check_branch
      %72 = sbr.rel (0) target = $region45
    $region44: #{_generate.1} parent=1 // pred_region
      %74 = dma.done [#allocation5], 1024
    $region45: #{_generate.1} parent=1 // pred_fallthru
      _
    // Predicated region
    $region46: #{_generate.1} parent=1 // pred_check
      _
    $region47: #{_generate.1} parent=1 // pred_check_branch
      %76 = sbr.rel (0) target = $region49
    $region48: #{_generate.1} parent=1 // pred_region
      %78 = dma.done [#allocation8], 1024
    $region49: #{_generate.1} parent=1 // pred_fallthru
      _
    // Predicated region
    $region50: #{_generate.1} parent=1 // pred_check
      _
    $region51: #{_generate.1} parent=1 // pred_check_branch
      %80 = sbr.rel (0) target = $region53
    $region52: #{_generate.1} parent=1 // pred_region
      %82 = dma.done [#allocation8], 1024
    $region53: #{_generate.1} parent=1 // pred_fallthru
      _
    %v83 = vlaneseq
    %v84 = vand.u32 %v83, 127
    %p85 = scmp.eq.s32.totalorder 0, 0
    // Predicated region
    $region54: #{_generate.1} parent=1 // pred_check
      %p86 = pneg %p85
    $region55: #{_generate.1} parent=1 // pred_check_branch
      %88 = sbr.rel (%p86) target = $region57
    $region56: #{_generate.1} parent=1 // pred_region
      %v89 = vld [vmem:[%s0] sm:$0xff]
      %90 = vset.pattern.permute.xlu0 0
      %91 = vperm.xlu0 %90, %v89
      %v92 = vpop.permute.xlu0 %91
      %vm93 = vcmp.eq.s32.totalorder %v84, %v92
      %v94 = vsel %vm93, 1, 0
      %v95 = vcvt.s32.f32 %v94
      %v96 = vpack.c.bf16 %v95, %v95
      %97 = vst [vmem:[#allocation2] sm:$0xf] %v96
      %v98 = vld [vmem:[%s1] sm:$0xff]
      %vm99 = vcmask 7168
      %100 = vst.msk [vmem:[#allocation3] sm:$0xff] %vm99, %v98
    $region57: #{_generate.1} parent=1 // pred_fallthru
      _
    %v101 = vld [vmem:[#allocation4] sm:$0xf]
    %v102 = vld [vmem:[#allocation4 + $0x4] sm:$0xf]
    %v103 = vld [vmem:[#allocation4 + $0x8] sm:$0xf]
    %v104 = vld [vmem:[#allocation4 + $0xc] sm:$0xf]
    %v105 = vld [vmem:[#allocation4 + $0x10] sm:$0xf]
    %v106 = vld [vmem:[#allocation4 + $0x14] sm:$0xf]
    %v107 = vld [vmem:[#allocation4 + $0x18] sm:$0xf]
    %v108 = vld [vmem:[#allocation4 + $0x1c] sm:$0xf]
    %v109 = vld [vmem:[#allocation4 + $0x20] sm:$0xf]
    %v110 = vld [vmem:[#allocation4 + $0x24] sm:$0xf]
    %v111 = vld [vmem:[#allocation4 + $0x28] sm:$0xf]
    %v112 = vld [vmem:[#allocation4 + $0x2c] sm:$0xf]
    %v113 = vld [vmem:[#allocation4 + $0x30] sm:$0xf]
    %v114 = vld [vmem:[#allocation4 + $0x34] sm:$0xf]
    %v115 = vld [vmem:[#allocation4 + $0x38] sm:$0xf]
    %v116 = vld [vmem:[#allocation4 + $0x3c] sm:$0xf]
    %v117 = vld [vmem:[%s3] sm:$0x1]
    %v118 = vld [vmem:[%s4] sm:$0x1]
    %v119 = vld [vmem:[#allocation7] sm:$0xf]
    %v120 = vld [vmem:[#allocation7 + $0x4] sm:$0xf]
    %v121 = vld [vmem:[#allocation7 + $0x8] sm:$0xf]
    %v122 = vld [vmem:[#allocation7 + $0xc] sm:$0xf]
    %v123 = vld [vmem:[#allocation7 + $0x10] sm:$0xf]
    %v124 = vld [vmem:[#allocation7 + $0x14] sm:$0xf]
    %v125 = vld [vmem:[#allocation7 + $0x18] sm:$0xf]
    %v126 = vld [vmem:[#allocation7 + $0x1c] sm:$0xf]
    %v127 = vld [vmem:[#allocation7 + $0x20] sm:$0xf]
    %v128 = vld [vmem:[#allocation7 + $0x24] sm:$0xf]
    %v129 = vld [vmem:[#allocation7 + $0x28] sm:$0xf]
    %v130 = vld [vmem:[#allocation7 + $0x2c] sm:$0xf]
    %v131 = vld [vmem:[#allocation7 + $0x30] sm:$0xf]
    %v132 = vld [vmem:[#allocation7 + $0x34] sm:$0xf]
    %v133 = vld [vmem:[#allocation7 + $0x38] sm:$0xf]
    %v134 = vld [vmem:[#allocation7 + $0x3c] sm:$0xf]
    %v135 = vld [vmem:[%s6] sm:$0x1]
    %v136 = vld [vmem:[#allocation9] sm:$0xf]
    %v137 = vld [vmem:[#allocation9 + $0x4] sm:$0xf]
    %v138 = vld [vmem:[#allocation9 + $0x8] sm:$0xf]
    %v139 = vld [vmem:[#allocation9 + $0xc] sm:$0xf]
    %v140 = vld [vmem:[#allocation9 + $0x10] sm:$0xf]
    %v141 = vld [vmem:[#allocation9 + $0x14] sm:$0xf]
    %v142 = vld [vmem:[#allocation9 + $0x18] sm:$0xf]
    %v143 = vld [vmem:[#allocation9 + $0x1c] sm:$0xf]
    %v144 = vld [vmem:[#allocation9 + $0x20] sm:$0xf]
    %v145 = vld [vmem:[#allocation9 + $0x24] sm:$0xf]
    %v146 = vld [vmem:[#allocation9 + $0x28] sm:$0xf]
    %v147 = vld [vmem:[#allocation9 + $0x2c] sm:$0xf]
    %v148 = vld [vmem:[#allocation9 + $0x30] sm:$0xf]
    %v149 = vld [vmem:[#allocation9 + $0x34] sm:$0xf]
    %v150 = vld [vmem:[#allocation9 + $0x38] sm:$0xf]
    %v151 = vld [vmem:[#allocation9 + $0x3c] sm:$0xf]
    %v152 = vld [vmem:[%s9] sm:$0xff]
    %v153 = vld [vmem:[#allocation2] sm:$0xf]
    %v154 = vld [vmem:[#allocation3] sm:$0xff]
    loop: start=0, step=1, limit=128
    $region58: #{_generate.1} parent=1 // loop_pre_header
      _
    $region59: #{_generate.1} parent=1 // loop_header
      %s156 = sphi 0, %s160
      %p157 = scmp.ge.s32.totalorder %s156, 128
      %v161 = vphi %v153, %v402
      %v162 = vphi %v154, %v403
      %v163 = vphi 0, %v398
    $region60: #{_generate.1} parent=1 // loop_header_branch
      %159 = sbr.rel (%p157) target = $region64
    $region61: #{_generate.1} parent=1 // loop_body
      %165 = vset.pattern.permute.xlu0 0
      %166 = vperm.xlu0 %165, %v162
      %v167 = vpop.permute.xlu0 %166
      %v170 = vperm.slane %v117, 0
      %v172 = vmul.f32 %v167, %v170
      %v189 = vunpack.c.l.b16 %v101
      %v190 = vunpack.c.l.b16 %v102
      %v191 = vunpack.c.l.b16 %v103
      %v192 = vunpack.c.l.b16 %v104
      %v193 = vunpack.c.l.b16 %v105
      %v194 = vunpack.c.l.b16 %v106
      %v195 = vunpack.c.l.b16 %v107
      %v196 = vunpack.c.l.b16 %v108
      %v197 = vunpack.c.l.b16 %v109
      %v198 = vunpack.c.l.b16 %v110
      %v199 = vunpack.c.l.b16 %v111
      %v200 = vunpack.c.l.b16 %v112
      %v201 = vunpack.c.l.b16 %v113
      %v202 = vunpack.c.l.b16 %v114
      %v203 = vunpack.c.l.b16 %v115
      %v204 = vunpack.c.l.b16 %v116
      %v205 = vpack.c.b16 %v190, %v189
      %v206 = vpack.c.b16 %v192, %v191
      %v207 = vpack.c.b16 %v194, %v193
      %v208 = vpack.c.b16 %v196, %v195
      %v209 = vpack.c.b16 %v198, %v197
      %v210 = vpack.c.b16 %v200, %v199
      %v211 = vpack.c.b16 %v202, %v201
      %v212 = vpack.c.b16 %v204, %v203
      %221 = vmatpush.bf16.msra.mxu0 %v212
      %222 = vmatpush.bf16.msra.mxu0 %v211
      %223 = vmatpush.bf16.msra.mxu0 %v210
      %224 = vmatpush.bf16.msra.mxu0 %v209
      %225 = vmatpush.bf16.msra.mxu0 %v208
      %226 = vmatpush.bf16.msra.mxu0 %v207
      %227 = vmatpush.bf16.msra.mxu0 %v206
      %228 = vmatpush.bf16.msra.mxu0 %v205
      %229 = vmatmul.bf16.gmra.mxu0 %v161
      %v230 = vpop.f32.mrf.mxu0
      %v231 = vadd.f32 %v172, %v230
      %v232 = vpop.f32.mrf.mxu0
      %233 = vdwg.mxu0
      %v235 = vperm.slane %v118, 0
      %v237 = vadd.f32 %v231, %v235
      %v238 = vtanh.pop %v237
      %v239 = vpack.c.bf16 %v238, %v238
      %v241 = vperm.slane %v135, 0
      %v259 = vunpack.c.l.b16 %v119
      %v260 = vunpack.c.l.b16 %v120
      %v261 = vunpack.c.l.b16 %v121
      %v262 = vunpack.c.l.b16 %v122
      %v263 = vunpack.c.l.b16 %v123
      %v264 = vunpack.c.l.b16 %v124
      %v265 = vunpack.c.l.b16 %v125
      %v266 = vunpack.c.l.b16 %v126
      %v267 = vunpack.c.l.b16 %v127
      %v268 = vunpack.c.l.b16 %v128
      %v269 = vunpack.c.l.b16 %v129
      %v270 = vunpack.c.l.b16 %v130
      %v271 = vunpack.c.l.b16 %v131
      %v272 = vunpack.c.l.b16 %v132
      %v273 = vunpack.c.l.b16 %v133
      %v274 = vunpack.c.l.b16 %v134
      %v275 = vpack.c.b16 %v260, %v259
      %v276 = vpack.c.b16 %v262, %v261
      %v277 = vpack.c.b16 %v264, %v263
      %v278 = vpack.c.b16 %v266, %v265
      %v279 = vpack.c.b16 %v268, %v267
      %v280 = vpack.c.b16 %v270, %v269
      %v281 = vpack.c.b16 %v272, %v271
      %v282 = vpack.c.b16 %v274, %v273
      %291 = vmatpush.bf16.msra.mxu0 %v282
      %292 = vmatpush.bf16.msra.mxu0 %v281
      %293 = vmatpush.bf16.msra.mxu0 %v280
      %294 = vmatpush.bf16.msra.mxu0 %v279
      %295 = vmatpush.bf16.msra.mxu0 %v278
      %296 = vmatpush.bf16.msra.mxu0 %v277
      %297 = vmatpush.bf16.msra.mxu0 %v276
      %298 = vmatpush.bf16.msra.mxu0 %v275
      %299 = vmatmul.bf16.gmra.mxu0 %v239
      %v300 = vpop.f32.mrf.mxu0
      %v301 = vadd.f32 %v241, %v300
      %v302 = vpop.f32.mrf.mxu0
      %303 = vdwg.mxu0
      %v304 = vmul.f32 %v301, 1.1111112
      %305 = vmax.xlane.f32.xlu0 %v304
      %v306 = vpop.xlane.xlu0 %305
      %v307 = vsub.f32 %v304, %v306
      %v308 = vmul.f32 %v307, 1.442695
      %v309 = vpow.pop %v308
      %vm310 = vcmp.eq.s32.totalorder %v84, 0
      %v311 = vsel %vm310, 0.0, %v309
      %v312 = vpack.c.bf16 %v311, %v311
      %v329 = vunpack.c.l.b16 %v136
      %v330 = vunpack.c.l.b16 %v137
      %v331 = vunpack.c.l.b16 %v138
      %v332 = vunpack.c.l.b16 %v139
      %v333 = vunpack.c.l.b16 %v140
      %v334 = vunpack.c.l.b16 %v141
      %v335 = vunpack.c.l.b16 %v142
      %v336 = vunpack.c.l.b16 %v143
      %v337 = vunpack.c.l.b16 %v144
      %v338 = vunpack.c.l.b16 %v145
      %v339 = vunpack.c.l.b16 %v146
      %v340 = vunpack.c.l.b16 %v147
      %v341 = vunpack.c.l.b16 %v148
      %v342 = vunpack.c.l.b16 %v149
      %v343 = vunpack.c.l.b16 %v150
      %v344 = vunpack.c.l.b16 %v151
      %v345 = vpack.c.b16 %v330, %v329
      %v346 = vpack.c.b16 %v332, %v331
      %v347 = vpack.c.b16 %v334, %v333
      %v348 = vpack.c.b16 %v336, %v335
      %v349 = vpack.c.b16 %v338, %v337
      %v350 = vpack.c.b16 %v340, %v339
      %v351 = vpack.c.b16 %v342, %v341
      %v352 = vpack.c.b16 %v344, %v343
      %361 = vmatpush.bf16.msra.mxu0 %v352
      %362 = vmatpush.bf16.msra.mxu0 %v351
      %363 = vmatpush.bf16.msra.mxu0 %v350
      %364 = vmatpush.bf16.msra.mxu0 %v349
      %365 = vmatpush.bf16.msra.mxu0 %v348
      %366 = vmatpush.bf16.msra.mxu0 %v347
      %367 = vmatpush.bf16.msra.mxu0 %v346
      %368 = vmatpush.bf16.msra.mxu0 %v345
      %369 = vmatmul.bf16.gmra.mxu0 %v312
      %v370 = vpop.f32.mrf.mxu0
      %v371 = vadd.f32 0.0, %v370
      %v372 = vpop.f32.mrf.mxu0
      %373 = vdwg.mxu0
      %374 = vmax.xlane.f32.xlu0 %v371
      %v375 = vpop.xlane.xlu0 %374
      %v376 = vstv %s156
      %vm377 = vcmp.eq.s32.totalorder %v84, %v376
      %v378 = vsel %vm377, %v152, 0.0
      %379 = vadd.xlane.f32.xlu0 %v378
      %v380 = vpop.xlane.xlu0 %379
      %v381 = vmul.f32 %v380, %v375
      %vm382 = vcmp.lt.f32.partialorder %v371, %v381
      %v383 = vsel %vm382, 1, 0
      %v384 = vand.u32 %v383, 65535
      %v385 = vshrl.u32 %v383, 16
      %v386 = vcvt.s32.f32 %v384
      %v387 = vcvt.s32.f32 %v385
      %388 = vadd.xlane.f32.xlu0 %v386
      %v389 = vpop.xlane.xlu0 %388
      %390 = vadd.xlane.f32.xlu0 %v387
      %v391 = vpop.xlane.xlu0 %390
      %v392 = vcvt.f32.s32 %v389
      %v393 = vcvt.f32.s32 %v391
      %v394 = vshll.u32 %v393, 16
      %v395 = vadd.s32 %v394, %v392
      %vm396 = vcmp.lt.s32.totalorder %v395, 127
      %v397 = vsel %vm396, %v395, 127
      %v398 = vsel %vm377, %v397, %v163
      %vm399 = vcmp.eq.s32.totalorder %v84, %v397
      %v400 = vsel %vm399, 1, 0
      %v401 = vcvt.s32.f32 %v400
      %v402 = vpack.c.bf16 %v401, %v401
      %v403 = vadd.f32 %v162, 1.0
    $region62: #{_generate.1} parent=1 // loop_footer
      %s160 = sadd.s32 1, %s156
    $region63: #{_generate.1} parent=1 // loop_footer_branch
      %155 = sbr.rel target = $region59
    $region64: #{_generate.1} parent=1 // loop_exit
      _
    %404 = vst [vmem:[#allocation2] sm:$0xf] %v161
    %vm405 = vcmask 7168
    %406 = vst.msk [vmem:[#allocation3] sm:$0xff] %vm405, %v162
    %407 = vst [vmem:[#allocation10] sm:$0xff] %v163
    // Predicated region
    $region65: #{_generate.1} parent=1 // pred_check
      _
    $region66: #{_generate.1} parent=1 // pred_check_branch
      %409 = sbr.rel (0) target = $region68
    $region67: #{_generate.1} parent=1 // pred_region
      %411 = vsyncadd [#allocation6], 0
      %s413 = sshll.u32 [#allocation10], 4
      %s414 = int_to_ptr.vmem [resolvable:$true] %s413
      %s415 = sshll.u32 %s10, 4
      %s416 = int_to_ptr.hbm [resolvable:$true] %s415
      %418 = dma.vmem_to_hbm [thread:$0]  %s414, 128, %s416, [#allocation6]
    $region68: #{_generate.1} parent=1 // pred_fallthru
      _
    // Predicated region
    $region69: #{_generate.1} parent=1 // pred_check
      _
    $region70: #{_generate.1} parent=1 // pred_check_branch
      %420 = sbr.rel (0) target = $region72
    $region71: #{_generate.1} parent=1 // pred_region
      %422 = dma.done [#allocation6], 128
    $region72: #{_generate.1} parent=1 // pred_fallthru
      _
    %423 = vsyncpa [#allocation5], 1
    %424 = vsyncpa [#allocation8], 1
    %425 = vsyncpa [#allocation6], 1

</llo_original>
